<compile_context>
chip_gen: v7x
topology: tpu7x:2x2x1
jax: 0.10.0
libtpu: 0.0.40
codegen_flags: <defaults>
</compile_context>

<pallas_src>
import functools

import jax
import jax.numpy as jnp
from jax.experimental import pallas as pl
from jax.experimental.pallas import tpu as pltpu

_LANE = 128
_SUBLANE = 8


def _round_up(n, m):
    return (n + m - 1) // m * m


def _autoencoder_kernel(x_ref,
                        w1_ref, b1_ref,
                        w2_ref, b2_ref,
                        w3_ref, b3_ref,
                        w4_ref, b4_ref,
                        o_ref):
    """Fused 4-layer MLP autoencoder forward for one lane-dense batch tile."""
    x = x_ref[...]                 # (tile_b, D_pad) in matmul dtype (f32 or bf16)
    mm_dtype = x.dtype

    # Hoist biases once per grid step; broadcast via `+` (all f32).
    b1 = b1_ref[...]
    b2 = b2_ref[...]
    b3 = b3_ref[...]
    b4 = b4_ref[...]

    def lrelu(v):
        return jnp.where(v > 0, v, 0.2 * v)

    # encoder
    h = lrelu(jnp.dot(x, w1_ref[...], preferred_element_type=jnp.float32) + b1)
    z = lrelu(jnp.dot(h.astype(mm_dtype), w2_ref[...],
                      preferred_element_type=jnp.float32) + b2)
    # decoder
    d = lrelu(jnp.dot(z.astype(mm_dtype), w3_ref[...],
                      preferred_element_type=jnp.float32) + b3)
    y = jnp.dot(d.astype(mm_dtype), w4_ref[...],
                preferred_element_type=jnp.float32) + b4

    o_ref[...] = jax.nn.sigmoid(y).astype(o_ref.dtype)


@functools.partial(jax.jit, static_argnames=("batch_tile", "matmul_dtype"))
def flexible_autoencoder(x, params, *, batch_tile=512, matmul_dtype=jnp.bfloat16):
    """Run the fused autoencoder kernel, tiling over the (padded) batch dim.

    Feature dims are zero-padded to multiples of 128 (lane-dense loads/stores);
    padded lanes hold exact zeros through every LeakyReLU layer and are sliced
    off after the call.  Pass matmul_dtype=jnp.float32 for bit-faithful f32 math
    (e.g. on v5e or for testing); bf16 (default) is the fast v6e/v7x MXU path.
    """
    w1, b1, w2, b2, w3, b3, w4, b4 = params
    B, input_dim = x.shape
    hidden_dim = w1.shape[1]
    bottleneck_dim = w2.shape[1]
    out_dtype = x.dtype

    # Lane-dense padding of feature dims.
    D = _round_up(input_dim, _LANE)
    H = _round_up(hidden_dim, _LANE)
    Z = _round_up(bottleneck_dim, _LANE)

    # Batch tiling: sublane-align, then pad to a multiple of the tile.
    B8 = _round_up(B, _SUBLANE)
    tile_b = min(batch_tile, B8)
    Bp = _round_up(B8, tile_b)
    grid = (Bp // tile_b,)

    def pad2(a, rows, cols, dtype):
        a = a.astype(dtype)
        return jnp.pad(a, ((0, rows - a.shape[0]), (0, cols - a.shape[1])))

    xp = pad2(x, Bp, D, matmul_dtype)
    w1p = pad2(w1, D, H, matmul_dtype)
    b1p = pad2(b1.reshape(1, -1), 1, H, jnp.float32)
    w2p = pad2(w2, H, Z, matmul_dtype)
    b2p = pad2(b2.reshape(1, -1), 1, Z, jnp.float32)
    w3p = pad2(w3, Z, H, matmul_dtype)
    b3p = pad2(b3.reshape(1, -1), 1, H, jnp.float32)
    w4p = pad2(w4, H, D, matmul_dtype)
    b4p = pad2(b4.reshape(1, -1), 1, D, jnp.float32)

    def full_spec(arr):
        # Whole (tiny) array resident in VMEM; constant block index so Pallas
        # does not re-fetch it between grid steps.
        return pl.BlockSpec(arr.shape, lambda i: (0, 0))

    mm_bytes = jnp.dtype(matmul_dtype).itemsize
    out_bytes = jnp.dtype(out_dtype).itemsize
    weight_elems = D * H + H * Z + Z * H + H * D
    bias_elems = 2 * H + Z + D

    # Explicit VMEM budget: double-buffered x/out tiles + resident weights/biases
    # + f32 intermediates, with margin.  Capped below v7x's 64 MiB physical VMEM.
    vmem_est = (2 * tile_b * D * (mm_bytes + out_bytes)
                + 2 * weight_elems * mm_bytes
                + 2 * bias_elems * 4
                + tile_b * (2 * H + Z + D) * 4)
    vmem_limit = int(min(max(int(1.5 * vmem_est) + (4 << 20), 32 << 20), 60 << 20))

    cost = pl.CostEstimate(
        flops=2 * Bp * (D * H + H * Z + Z * H + H * D),
        transcendentals=Bp * D,  # sigmoid on the output tile
        bytes_accessed=(Bp * D * (mm_bytes + out_bytes)
                        + weight_elems * mm_bytes + bias_elems * 4),
    )

    out = pl.pallas_call(
        _autoencoder_kernel,
        out_shape=jax.ShapeDtypeStruct((Bp, D), out_dtype),
        grid_spec=pltpu.PrefetchScalarGridSpec(
            num_scalar_prefetch=0,
            grid=grid,
            in_specs=[
                pl.BlockSpec((tile_b, D), lambda i: (i, 0)),
                full_spec(w1p), full_spec(b1p),
                full_spec(w2p), full_spec(b2p),
                full_spec(w3p), full_spec(b3p),
                full_spec(w4p), full_spec(b4p),
            ],
            out_specs=pl.BlockSpec((tile_b, D), lambda i: (i, 0)),
        ),
        compiler_params=pltpu.CompilerParams(
            dimension_semantics=("parallel",),
            vmem_limit_bytes=vmem_limit,
        ),
        cost_estimate=cost,
    )(xp, w1p, b1p, w2p, b2p, w3p, b3p, w4p, b4p)

    # Slice off batch padding and the padded output lanes (which hold sigmoid(0)).
    return out[:B, :input_dim]


def init_params(key, input_dim, hidden_dim=64, bottleneck_dim=3, dtype=jnp.float32):
    """Deterministic Xavier-uniform weights / zero biases, mirroring _init_weights."""
    def xavier_uniform(k, fan_in, fan_out):
        bound = (6.0 / (fan_in + fan_out)) ** 0.5
        return jax.random.uniform(k, (fan_in, fan_out), dtype,
                                  minval=-bound, maxval=bound)

    k1, k2, k3, k4 = jax.random.split(key, 4)
    w1 = xavier_uniform(k1, input_dim, hidden_dim)
    b1 = jnp.zeros((1, hidden_dim), dtype)
    w2 = xavier_uniform(k2, hidden_dim, bottleneck_dim)
    b2 = jnp.zeros((1, bottleneck_dim), dtype)
    w3 = xavier_uniform(k3, bottleneck_dim, hidden_dim)
    b3 = jnp.zeros((1, hidden_dim), dtype)
    w4 = xavier_uniform(k4, hidden_dim, input_dim)
    b4 = jnp.zeros((1, input_dim), dtype)
    return (w1, b1, w2, b2, w3, b3, w4, b4)


def _reference_forward(x, params):
    """Pure-JAX f32 reference of the same forward pass."""
    w1, b1, w2, b2, w3, b3, w4, b4 = params
    hi = jax.lax.Precision.HIGHEST
    lrelu = lambda v: jnp.where(v > 0, v, 0.2 * v)
    h = lrelu(jnp.dot(x, w1, precision=hi) + b1)
    z = lrelu(jnp.dot(h, w2, precision=hi) + b2)
    d = lrelu(jnp.dot(z, w3, precision=hi) + b3)
    return jax.nn.sigmoid(jnp.dot(d, w4, precision=hi) + b4)


if __name__ == "__main__":
    key = jax.random.PRNGKey(0)
    k_x, k_x2, k_p = jax.random.split(key, 3)

    input_dim = 32
    hidden_dim = 64
    bottleneck_dim = 3
    params = init_params(k_p, input_dim, hidden_dim, bottleneck_dim)

    # Small-shape check (module's toy config), f32 matmul path -> tight tolerance.
    x = jax.random.normal(k_x, (8, input_dim), jnp.float32)
    out_f32 = jax.block_until_ready(
        flexible_autoencoder(x, params, batch_tile=512, matmul_dtype=jnp.float32))
    ref = _reference_forward(x, params)
    assert out_f32.shape == x.shape
    assert jnp.allclose(out_f32, ref, atol=1e-4, rtol=1e-4), \
        float(jnp.max(jnp.abs(out_f32 - ref)))

    # Multi-tile path (batch padding, >1 grid step) with bf16 matmul operands
    # (v6e/v7x fast path) -> looser tolerance.
    x2 = jax.random.normal(k_x2, (130, input_dim), jnp.float32)
    out_bf16 = jax.block_until_ready(
        flexible_autoencoder(x2, params, batch_tile=64, matmul_dtype=jnp.bfloat16))
    ref2 = _reference_forward(x2, params)
    assert out_bf16.shape == x2.shape
    assert jnp.allclose(out_bf16, ref2, atol=2e-2, rtol=2e-2), \
        float(jnp.max(jnp.abs(out_bf16 - ref2)))

    print("KERNEL_OK")
</pallas_src>

<mosaic_0001>
module attributes {stable_mosaic.version = 11 : i64} {
  func.func @_autoencoder_kernel(%arg0: i32, %arg1: memref<8x128xf32, #tpu.memory_space<vmem>>, %arg2: memref<128x128xf32, #tpu.memory_space<vmem>>, %arg3: memref<1x128xf32, #tpu.memory_space<vmem>>, %arg4: memref<128x128xf32, #tpu.memory_space<vmem>>, %arg5: memref<1x128xf32, #tpu.memory_space<vmem>>, %arg6: memref<128x128xf32, #tpu.memory_space<vmem>>, %arg7: memref<1x128xf32, #tpu.memory_space<vmem>>, %arg8: memref<128x128xf32, #tpu.memory_space<vmem>>, %arg9: memref<1x128xf32, #tpu.memory_space<vmem>>, %arg10: memref<8x128xf32, #tpu.memory_space<vmem>>) attributes {dimension_semantics = [#tpu.dimension_semantics<parallel>], iteration_bounds = array<i64: 1>, scalar_prefetch = 0 : i64, scratch_operands = 0 : i64, tpu.core_type = #tpu.core_type<tc>, window_params = [{transform_indices = @transform_0, window_bounds = array<i64: 8, 128>}, {pipeline_mode = #tpu.pipeline_mode<synchronous>, transform_indices = @transform_1, window_bounds = array<i64: 128, 128>}, {pipeline_mode = #tpu.pipeline_mode<synchronous>, transform_indices = @transform_2, window_bounds = array<i64: 1, 128>}, {pipeline_mode = #tpu.pipeline_mode<synchronous>, transform_indices = @transform_3, window_bounds = array<i64: 128, 128>}, {pipeline_mode = #tpu.pipeline_mode<synchronous>, transform_indices = @transform_4, window_bounds = array<i64: 1, 128>}, {pipeline_mode = #tpu.pipeline_mode<synchronous>, transform_indices = @transform_5, window_bounds = array<i64: 128, 128>}, {pipeline_mode = #tpu.pipeline_mode<synchronous>, transform_indices = @transform_6, window_bounds = array<i64: 1, 128>}, {pipeline_mode = #tpu.pipeline_mode<synchronous>, transform_indices = @transform_7, window_bounds = array<i64: 128, 128>}, {pipeline_mode = #tpu.pipeline_mode<synchronous>, transform_indices = @transform_8, window_bounds = array<i64: 1, 128>}, {transform_indices = @transform_9, window_bounds = array<i64: 8, 128>}]} {
    %c0 = arith.constant 0 : index
    %c0_0 = arith.constant 0 : index
    %0 = vector.load %arg1[%c0, %c0_0] : memref<8x128xf32, #tpu.memory_space<vmem>>, vector<8x128xf32>
    %c0_1 = arith.constant 0 : index
    %c0_2 = arith.constant 0 : index
    %1 = vector.load %arg3[%c0_1, %c0_2] : memref<1x128xf32, #tpu.memory_space<vmem>>, vector<1x128xf32>
    %c0_3 = arith.constant 0 : index
    %c0_4 = arith.constant 0 : index
    %2 = vector.load %arg5[%c0_3, %c0_4] : memref<1x128xf32, #tpu.memory_space<vmem>>, vector<1x128xf32>
    %c0_5 = arith.constant 0 : index
    %c0_6 = arith.constant 0 : index
    %3 = vector.load %arg7[%c0_5, %c0_6] : memref<1x128xf32, #tpu.memory_space<vmem>>, vector<1x128xf32>
    %c0_7 = arith.constant 0 : index
    %c0_8 = arith.constant 0 : index
    %4 = vector.load %arg9[%c0_7, %c0_8] : memref<1x128xf32, #tpu.memory_space<vmem>>, vector<1x128xf32>
    %c0_9 = arith.constant 0 : index
    %c0_10 = arith.constant 0 : index
    %5 = vector.load %arg2[%c0_9, %c0_10] : memref<128x128xf32, #tpu.memory_space<vmem>>, vector<128x128xf32>
    %cst = arith.constant dense<0.000000e+00> : vector<8x128xf32>
    %6 = tpu.matmul %0, %5, %cst {dimension_numbers = #tpu.dot_dimension_numbers<[1], [0], [0], [1], [0, 0, 1, 1], [], []>} : vector<8x128xf32>, vector<128x128xf32>, vector<8x128xf32> -> vector<8x128xf32>
    %7 = vector.broadcast %1 : vector<1x128xf32> to vector<8x128xf32>
    %8 = arith.addf %6, %7 : vector<8x128xf32>
    %cst_11 = arith.constant 0.000000e+00 : f32
    %9 = vector.broadcast %cst_11 : f32 to vector<8x128xf32>
    %10 = arith.cmpf ogt, %8, %9 : vector<8x128xf32>
    %cst_12 = arith.constant 2.000000e-01 : f32
    %11 = vector.broadcast %cst_12 : f32 to vector<8x128xf32>
    %12 = arith.mulf %11, %8 : vector<8x128xf32>
    %13 = arith.select %10, %8, %12 : vector<8x128xi1>, vector<8x128xf32>
    %c0_13 = arith.constant 0 : index
    %c0_14 = arith.constant 0 : index
    %14 = vector.load %arg4[%c0_13, %c0_14] : memref<128x128xf32, #tpu.memory_space<vmem>>, vector<128x128xf32>
    %cst_15 = arith.constant dense<0.000000e+00> : vector<8x128xf32>
    %15 = tpu.matmul %13, %14, %cst_15 {dimension_numbers = #tpu.dot_dimension_numbers<[1], [0], [0], [1], [0, 0, 1, 1], [], []>} : vector<8x128xf32>, vector<128x128xf32>, vector<8x128xf32> -> vector<8x128xf32>
    %16 = vector.broadcast %2 : vector<1x128xf32> to vector<8x128xf32>
    %17 = arith.addf %15, %16 : vector<8x128xf32>
    %cst_16 = arith.constant 0.000000e+00 : f32
    %18 = vector.broadcast %cst_16 : f32 to vector<8x128xf32>
    %19 = arith.cmpf ogt, %17, %18 : vector<8x128xf32>
    %cst_17 = arith.constant 2.000000e-01 : f32
    %20 = vector.broadcast %cst_17 : f32 to vector<8x128xf32>
    %21 = arith.mulf %20, %17 : vector<8x128xf32>
    %22 = arith.select %19, %17, %21 : vector<8x128xi1>, vector<8x128xf32>
    %c0_18 = arith.constant 0 : index
    %c0_19 = arith.constant 0 : index
    %23 = vector.load %arg6[%c0_18, %c0_19] : memref<128x128xf32, #tpu.memory_space<vmem>>, vector<128x128xf32>
    %cst_20 = arith.constant dense<0.000000e+00> : vector<8x128xf32>
    %24 = tpu.matmul %22, %23, %cst_20 {dimension_numbers = #tpu.dot_dimension_numbers<[1], [0], [0], [1], [0, 0, 1, 1], [], []>} : vector<8x128xf32>, vector<128x128xf32>, vector<8x128xf32> -> vector<8x128xf32>
    %25 = vector.broadcast %3 : vector<1x128xf32> to vector<8x128xf32>
    %26 = arith.addf %24, %25 : vector<8x128xf32>
    %cst_21 = arith.constant 0.000000e+00 : f32
    %27 = vector.broadcast %cst_21 : f32 to vector<8x128xf32>
    %28 = arith.cmpf ogt, %26, %27 : vector<8x128xf32>
    %cst_22 = arith.constant 2.000000e-01 : f32
    %29 = vector.broadcast %cst_22 : f32 to vector<8x128xf32>
    %30 = arith.mulf %29, %26 : vector<8x128xf32>
    %31 = arith.select %28, %26, %30 : vector<8x128xi1>, vector<8x128xf32>
    %c0_23 = arith.constant 0 : index
    %c0_24 = arith.constant 0 : index
    %32 = vector.load %arg8[%c0_23, %c0_24] : memref<128x128xf32, #tpu.memory_space<vmem>>, vector<128x128xf32>
    %cst_25 = arith.constant dense<0.000000e+00> : vector<8x128xf32>
    %33 = tpu.matmul %31, %32, %cst_25 {dimension_numbers = #tpu.dot_dimension_numbers<[1], [0], [0], [1], [0, 0, 1, 1], [], []>} : vector<8x128xf32>, vector<128x128xf32>, vector<8x128xf32> -> vector<8x128xf32>
    %34 = vector.broadcast %4 : vector<1x128xf32> to vector<8x128xf32>
    %35 = arith.addf %33, %34 : vector<8x128xf32>
    %36 = arith.negf %35 : vector<8x128xf32>
    %37 = math.exp %36 : vector<8x128xf32>
    %cst_26 = arith.constant 1.000000e+00 : f32
    %38 = vector.broadcast %cst_26 : f32 to vector<8x128xf32>
    %39 = arith.addf %38, %37 : vector<8x128xf32>
    %40 = arith.divf %38, %39 : vector<8x128xf32>
    %c0_27 = arith.constant 0 : index
    %c0_28 = arith.constant 0 : index
    %41 = vector.load %arg10[%c0_27, %c0_28] : memref<8x128xf32, #tpu.memory_space<vmem>>, vector<8x128xf32>
    tpu.vector_store %arg10[%c0_27, %c0_28], %40 {strides = array<i32>} : memref<8x128xf32, #tpu.memory_space<vmem>>, vector<8x128xf32>,
    return
  }
  func.func @transform_0(%arg0: i32) -> (i32, i32) {
    %c0_i32 = arith.constant 0 : i32
    %c0_i32_0 = arith.constant 0 : i32
    return %arg0, %c0_i32 : i32, i32
  }
  func.func @transform_1(%arg0: i32) -> (i32, i32) {
    %c0_i32 = arith.constant 0 : i32
    %c0_i32_0 = arith.constant 0 : i32
    %c0_i32_1 = arith.constant 0 : i32
    return %c0_i32, %c0_i32_0 : i32, i32
  }
  func.func @transform_2(%arg0: i32) -> (i32, i32) {
    %c0_i32 = arith.constant 0 : i32
    %c0_i32_0 = arith.constant 0 : i32
    %c0_i32_1 = arith.constant 0 : i32
    return %c0_i32, %c0_i32_0 : i32, i32
  }
  func.func @transform_3(%arg0: i32) -> (i32, i32) {
    %c0_i32 = arith.constant 0 : i32
    %c0_i32_0 = arith.constant 0 : i32
    %c0_i32_1 = arith.constant 0 : i32
    return %c0_i32, %c0_i32_0 : i32, i32
  }
  func.func @transform_4(%arg0: i32) -> (i32, i32) {
    %c0_i32 = arith.constant 0 : i32
    %c0_i32_0 = arith.constant 0 : i32
    %c0_i32_1 = arith.constant 0 : i32
    return %c0_i32, %c0_i32_0 : i32, i32
  }
  func.func @transform_5(%arg0: i32) -> (i32, i32) {
    %c0_i32 = arith.constant 0 : i32
    %c0_i32_0 = arith.constant 0 : i32
    %c0_i32_1 = arith.constant 0 : i32
    return %c0_i32, %c0_i32_0 : i32, i32
  }
  func.func @transform_6(%arg0: i32) -> (i32, i32) {
    %c0_i32 = arith.constant 0 : i32
    %c0_i32_0 = arith.constant 0 : i32
    %c0_i32_1 = arith.constant 0 : i32
    return %c0_i32, %c0_i32_0 : i32, i32
  }
  func.func @transform_7(%arg0: i32) -> (i32, i32) {
    %c0_i32 = arith.constant 0 : i32
    %c0_i32_0 = arith.constant 0 : i32
    %c0_i32_1 = arith.constant 0 : i32
    return %c0_i32, %c0_i32_0 : i32, i32
  }
  func.func @transform_8(%arg0: i32) -> (i32, i32) {
    %c0_i32 = arith.constant 0 : i32
    %c0_i32_0 = arith.constant 0 : i32
    %c0_i32_1 = arith.constant 0 : i32
    return %c0_i32, %c0_i32_0 : i32, i32
  }
  func.func @transform_9(%arg0: i32) -> (i32, i32) {
    %c0_i32 = arith.constant 0 : i32
    %c0_i32_0 = arith.constant 0 : i32
    return %arg0, %c0_i32 : i32, i32
  }
}

</mosaic_0001>

<llo_original>
// kernel: flexible_autoencoder.1
$region0: #{flexible_autoencoder.1}
  #allocation0 [shape = 'u32[]', space=smem, size = 0x4, offset = 0x4, fixed_abs, tag = 'smem constant byte address 0x4 - core index']
  #allocation1 [shape = 'u32[144,128]{1,0:T(1,128)}', space=vmem, size = 0x12000, scoped, tag = 'internal scratch']
  %s0 = inlined_call_operand.vmem [shape: f32[8,128], index: 0, kind: input, shape index: {}]
  %s1 = inlined_call_operand.vmem [shape: f32[128,128], index: 1, kind: input, shape index: {}]
  %s2 = inlined_call_operand.vmem [shape: f32[1,128], index: 2, kind: input, shape index: {}]
  %s3 = inlined_call_operand.vmem [shape: f32[128,128], index: 3, kind: input, shape index: {}]
  %s4 = inlined_call_operand.vmem [shape: f32[1,128], index: 4, kind: input, shape index: {}]
  %s5 = inlined_call_operand.vmem [shape: f32[128,128], index: 5, kind: input, shape index: {}]
  %s6 = inlined_call_operand.vmem [shape: f32[1,128], index: 6, kind: input, shape index: {}]
  %s7 = inlined_call_operand.vmem [shape: f32[128,128], index: 7, kind: input, shape index: {}]
  %s8 = inlined_call_operand.vmem [shape: f32[1,128], index: 8, kind: input, shape index: {}]
  %s9 = inlined_call_operand.hbm [shape: f32[8,128], index: 9, kind: output, shape index: {}]
  %s10 = sld [smem:[#allocation0]]
  $region46: #{flexible_autoencoder.1} parent=0
    _
  %s12 = ssub.s32 1, %s10
  %s13 = scalar_select 0, %s12, %s10
  $region1: #{flexible_autoencoder.1} parent=0
    #allocation2 [shape = 'u8[4096]{0}', space=vmem, size = 0x1000, scoped, tag = 'output window, operand 0, single buffered']
    #allocation3 [shape = 's32[1]{0}', space=sflag, size = 0x4, scoped, tag = 'scoped memory for flexible_autoencoder.1']
    %14 = vsyncpa [#allocation3], 0
    // Predicated region
    $region2: #{flexible_autoencoder.1} parent=1 // pred_check
      _
    $region3: #{flexible_autoencoder.1} parent=1 // pred_check_branch
      %16 = sbr.rel (0) target = $region5
    $region4: #{flexible_autoencoder.1} parent=1 // pred_region
      _
    $region5: #{flexible_autoencoder.1} parent=1 // pred_fallthru
      _
    // Predicated region
    $region6: #{flexible_autoencoder.1} parent=1 // pred_check
      _
    $region7: #{flexible_autoencoder.1} parent=1 // pred_check_branch
      %18 = sbr.rel (0) target = $region9
    $region8: #{flexible_autoencoder.1} parent=1 // pred_region
      _
    $region9: #{flexible_autoencoder.1} parent=1 // pred_fallthru
      _
    // Predicated region
    $region10: #{flexible_autoencoder.1} parent=1 // pred_check
      _
    $region11: #{flexible_autoencoder.1} parent=1 // pred_check_branch
      %20 = sbr.rel (0) target = $region13
    $region12: #{flexible_autoencoder.1} parent=1 // pred_region
      _
    $region13: #{flexible_autoencoder.1} parent=1 // pred_fallthru
      _
    // Predicated region
    $region14: #{flexible_autoencoder.1} parent=1 // pred_check
      _
    $region15: #{flexible_autoencoder.1} parent=1 // pred_check_branch
      %22 = sbr.rel (0) target = $region17
    $region16: #{flexible_autoencoder.1} parent=1 // pred_region
      _
    $region17: #{flexible_autoencoder.1} parent=1 // pred_fallthru
      _
    // Predicated region
    $region18: #{flexible_autoencoder.1} parent=1 // pred_check
      _
    $region19: #{flexible_autoencoder.1} parent=1 // pred_check_branch
      %24 = sbr.rel (0) target = $region21
    $region20: #{flexible_autoencoder.1} parent=1 // pred_region
      _
    $region21: #{flexible_autoencoder.1} parent=1 // pred_fallthru
      _
    // Predicated region
    $region22: #{flexible_autoencoder.1} parent=1 // pred_check
      _
    $region23: #{flexible_autoencoder.1} parent=1 // pred_check_branch
      %26 = sbr.rel (0) target = $region25
    $region24: #{flexible_autoencoder.1} parent=1 // pred_region
      _
    $region25: #{flexible_autoencoder.1} parent=1 // pred_fallthru
      _
    // Predicated region
    $region26: #{flexible_autoencoder.1} parent=1 // pred_check
      _
    $region27: #{flexible_autoencoder.1} parent=1 // pred_check_branch
      %28 = sbr.rel (0) target = $region29
    $region28: #{flexible_autoencoder.1} parent=1 // pred_region
      _
    $region29: #{flexible_autoencoder.1} parent=1 // pred_fallthru
      _
    // Predicated region
    $region30: #{flexible_autoencoder.1} parent=1 // pred_check
      _
    $region31: #{flexible_autoencoder.1} parent=1 // pred_check_branch
      %30 = sbr.rel (0) target = $region33
    $region32: #{flexible_autoencoder.1} parent=1 // pred_region
      _
    $region33: #{flexible_autoencoder.1} parent=1 // pred_fallthru
      _
    // Predicated region
    $region34: #{flexible_autoencoder.1} parent=1 // pred_check
      _
    $region35: #{flexible_autoencoder.1} parent=1 // pred_check_branch
      %32 = sbr.rel (0) target = $region37
    $region36: #{flexible_autoencoder.1} parent=1 // pred_region
      _
    $region37: #{flexible_autoencoder.1} parent=1 // pred_fallthru
      _
    %v33 = vld [vmem:[%s0] sm:$0xff]
    %v34 = vld [vmem:[%s2] sm:$0x1]
    %v35 = vld [vmem:[%s4] sm:$0x1]
    %v36 = vld [vmem:[%s6] sm:$0x1]
    %v37 = vld [vmem:[%s8] sm:$0x1]
    %v38 = vld [vmem:[%s1] sm:$0xff]
    %v39 = vld [vmem:[%s1 + $0x8] sm:$0xff]
    %v40 = vld [vmem:[%s1 + $0x10] sm:$0xff]
    %v41 = vld [vmem:[%s1 + $0x18] sm:$0xff]
    %v42 = vld [vmem:[%s1 + $0x20] sm:$0xff]
    %v43 = vld [vmem:[%s1 + $0x28] sm:$0xff]
    %v44 = vld [vmem:[%s1 + $0x30] sm:$0xff]
    %v45 = vld [vmem:[%s1 + $0x38] sm:$0xff]
    %v46 = vld [vmem:[%s1 + $0x40] sm:$0xff]
    %v47 = vld [vmem:[%s1 + $0x48] sm:$0xff]
    %v48 = vld [vmem:[%s1 + $0x50] sm:$0xff]
    %v49 = vld [vmem:[%s1 + $0x58] sm:$0xff]
    %v50 = vld [vmem:[%s1 + $0x60] sm:$0xff]
    %v51 = vld [vmem:[%s1 + $0x68] sm:$0xff]
    %v52 = vld [vmem:[%s1 + $0x70] sm:$0xff]
    %v53 = vld [vmem:[%s1 + $0x78] sm:$0xff]
    %v55 = vlaneseq
    %v56 = vshrl.u32 %v55, 7
    %v57 = vsub.s32 0, %v56
    %v58 = vrot.slane %v34, %v57
    %60 = vmatprep.subr.mxu0 0.0
    %61 = vmatpush1.msra.mxu0 %v38
    %62 = vmatprep.subr.mxu0 0.0
    %63 = vmatpush1.msra.mxu0 %v39
    %64 = vmatprep.subr.mxu0 0.0
    %65 = vmatpush1.msra.mxu0 %v40
    %66 = vmatprep.subr.mxu0 0.0
    %67 = vmatpush1.msra.mxu0 %v41
    %68 = vmatprep.subr.mxu0 0.0
    %69 = vmatpush1.msra.mxu0 %v42
    %70 = vmatprep.subr.mxu0 0.0
    %71 = vmatpush1.msra.mxu0 %v43
    %72 = vmatprep.subr.mxu0 0.0
    %73 = vmatpush1.msra.mxu0 %v44
    %74 = vmatprep.subr.mxu0 0.0
    %75 = vmatpush1.msra.mxu0 %v45
    %76 = vmatprep.subr.mxu0 0.0
    %77 = vmatpush1.msra.mxu0 %v46
    %78 = vmatprep.subr.mxu0 0.0
    %79 = vmatpush1.msra.mxu0 %v47
    %80 = vmatprep.subr.mxu0 0.0
    %81 = vmatpush1.msra.mxu0 %v48
    %82 = vmatprep.subr.mxu0 0.0
    %83 = vmatpush1.msra.mxu0 %v49
    %84 = vmatprep.subr.mxu0 0.0
    %85 = vmatpush1.msra.mxu0 %v50
    %86 = vmatprep.subr.mxu0 0.0
    %87 = vmatpush1.msra.mxu0 %v51
    %88 = vmatprep.subr.mxu0 0.0
    %89 = vmatpush1.msra.mxu0 %v52
    %90 = vmatprep.subr.mxu0 0.0
    %91 = vmatpush1.msra.mxu0 %v53
    %92 = vmatprep.subr.mxu0 0.0
    %93 = vmatpush1.msra.mxu0 0.0
    %94 = vmatprep.subr.mxu0 0.0
    %95 = vmatpush1.msra.mxu0 0.0
    %96 = vmatprep.subr.mxu0 0.0
    %97 = vmatpush1.msra.mxu0 0.0
    %98 = vmatprep.subr.mxu0 0.0
    %99 = vmatpush1.msra.mxu0 0.0
    %100 = vmatprep.subr.mxu0 0.0
    %101 = vmatpush1.msra.mxu0 0.0
    %102 = vmatprep.subr.mxu0 0.0
    %103 = vmatpush1.msra.mxu0 0.0
    %104 = vmatprep.subr.mxu0 0.0
    %105 = vmatpush1.msra.mxu0 0.0
    %106 = vmatprep.subr.mxu0 0.0
    %107 = vmatpush1.msra.mxu0 0.0
    %108 = vmatprep.subr.mxu0 0.0
    %109 = vmatpush1.msra.mxu0 0.0
    %110 = vmatprep.subr.mxu0 0.0
    %111 = vmatpush1.msra.mxu0 0.0
    %112 = vmatprep.subr.mxu0 0.0
    %113 = vmatpush1.msra.mxu0 0.0
    %114 = vmatprep.subr.mxu0 0.0
    %115 = vmatpush1.msra.mxu0 0.0
    %116 = vmatprep.subr.mxu0 0.0
    %117 = vmatpush1.msra.mxu0 0.0
    %118 = vmatprep.subr.mxu0 0.0
    %119 = vmatpush1.msra.mxu0 0.0
    %120 = vmatprep.subr.mxu0 0.0
    %121 = vmatpush1.msra.mxu0 0.0
    %122 = vmatprep.subr.mxu0 0.0
    %123 = vmatpush1.msra.mxu0 0.0
    %124 = vmatprep.mubr.f32.mxu0 0.0
    %125 = vmatmul.mubr.f32.gmra.mrb[0].mxu0 %v33
    %v126 = vpop.f32.mrb[0].mxu0
    %v127 = vadd.f32 %v58, %v126
    %v128 = vpop.f32.mrb[0].mxu0
    %129 = vdwg.mxu0
    %vm130 = vcmp.gt.f32.partialorder %v127, 0.0
    %v131 = vmul.f32 %v127, 0.2
    %v132 = vsel %vm130, %v127, %v131
    %v133 = vld [vmem:[%s3] sm:$0xff]
    %v134 = vld [vmem:[%s3 + $0x8] sm:$0xff]
    %v135 = vld [vmem:[%s3 + $0x10] sm:$0xff]
    %v136 = vld [vmem:[%s3 + $0x18] sm:$0xff]
    %v137 = vld [vmem:[%s3 + $0x20] sm:$0xff]
    %v138 = vld [vmem:[%s3 + $0x28] sm:$0xff]
    %v139 = vld [vmem:[%s3 + $0x30] sm:$0xff]
    %v140 = vld [vmem:[%s3 + $0x38] sm:$0xff]
    %v141 = vld [vmem:[%s3 + $0x40] sm:$0xff]
    %v142 = vld [vmem:[%s3 + $0x48] sm:$0xff]
    %v143 = vld [vmem:[%s3 + $0x50] sm:$0xff]
    %v144 = vld [vmem:[%s3 + $0x58] sm:$0xff]
    %v145 = vld [vmem:[%s3 + $0x60] sm:$0xff]
    %v146 = vld [vmem:[%s3 + $0x68] sm:$0xff]
    %v147 = vld [vmem:[%s3 + $0x70] sm:$0xff]
    %v148 = vld [vmem:[%s3 + $0x78] sm:$0xff]
    %v150 = vlaneseq
    %v151 = vshrl.u32 %v150, 7
    %v152 = vsub.s32 0, %v151
    %v153 = vrot.slane %v35, %v152
    %155 = vmatprep.subr.mxu0 0.0
    %156 = vmatpush1.msra.mxu0 %v133
    %157 = vmatprep.subr.mxu0 0.0
    %158 = vmatpush1.msra.mxu0 %v134
    %159 = vmatprep.subr.mxu0 0.0
    %160 = vmatpush1.msra.mxu0 %v135
    %161 = vmatprep.subr.mxu0 0.0
    %162 = vmatpush1.msra.mxu0 %v136
    %163 = vmatprep.subr.mxu0 0.0
    %164 = vmatpush1.msra.mxu0 %v137
    %165 = vmatprep.subr.mxu0 0.0
    %166 = vmatpush1.msra.mxu0 %v138
    %167 = vmatprep.subr.mxu0 0.0
    %168 = vmatpush1.msra.mxu0 %v139
    %169 = vmatprep.subr.mxu0 0.0
    %170 = vmatpush1.msra.mxu0 %v140
    %171 = vmatprep.subr.mxu0 0.0
    %172 = vmatpush1.msra.mxu0 %v141
    %173 = vmatprep.subr.mxu0 0.0
    %174 = vmatpush1.msra.mxu0 %v142
    %175 = vmatprep.subr.mxu0 0.0
    %176 = vmatpush1.msra.mxu0 %v143
    %177 = vmatprep.subr.mxu0 0.0
    %178 = vmatpush1.msra.mxu0 %v144
    %179 = vmatprep.subr.mxu0 0.0
    %180 = vmatpush1.msra.mxu0 %v145
    %181 = vmatprep.subr.mxu0 0.0
    %182 = vmatpush1.msra.mxu0 %v146
    %183 = vmatprep.subr.mxu0 0.0
    %184 = vmatpush1.msra.mxu0 %v147
    %185 = vmatprep.subr.mxu0 0.0
    %186 = vmatpush1.msra.mxu0 %v148
    %187 = vmatprep.subr.mxu0 0.0
    %188 = vmatpush1.msra.mxu0 0.0
    %189 = vmatprep.subr.mxu0 0.0
    %190 = vmatpush1.msra.mxu0 0.0
    %191 = vmatprep.subr.mxu0 0.0
    %192 = vmatpush1.msra.mxu0 0.0
    %193 = vmatprep.subr.mxu0 0.0
    %194 = vmatpush1.msra.mxu0 0.0
    %195 = vmatprep.subr.mxu0 0.0
    %196 = vmatpush1.msra.mxu0 0.0
    %197 = vmatprep.subr.mxu0 0.0
    %198 = vmatpush1.msra.mxu0 0.0
    %199 = vmatprep.subr.mxu0 0.0
    %200 = vmatpush1.msra.mxu0 0.0
    %201 = vmatprep.subr.mxu0 0.0
    %202 = vmatpush1.msra.mxu0 0.0
    %203 = vmatprep.subr.mxu0 0.0
    %204 = vmatpush1.msra.mxu0 0.0
    %205 = vmatprep.subr.mxu0 0.0
    %206 = vmatpush1.msra.mxu0 0.0
    %207 = vmatprep.subr.mxu0 0.0
    %208 = vmatpush1.msra.mxu0 0.0
    %209 = vmatprep.subr.mxu0 0.0
    %210 = vmatpush1.msra.mxu0 0.0
    %211 = vmatprep.subr.mxu0 0.0
    %212 = vmatpush1.msra.mxu0 0.0
    %213 = vmatprep.subr.mxu0 0.0
    %214 = vmatpush1.msra.mxu0 0.0
    %215 = vmatprep.subr.mxu0 0.0
    %216 = vmatpush1.msra.mxu0 0.0
    %217 = vmatprep.subr.mxu0 0.0
    %218 = vmatpush1.msra.mxu0 0.0
    %219 = vmatprep.mubr.f32.mxu0 0.0
    %220 = vmatmul.mubr.f32.gmra.mrb[0].mxu0 %v132
    %v221 = vpop.f32.mrb[0].mxu0
    %v222 = vadd.f32 %v153, %v221
    %v223 = vpop.f32.mrb[0].mxu0
    %224 = vdwg.mxu0
    %vm225 = vcmp.gt.f32.partialorder %v222, 0.0
    %v226 = vmul.f32 %v222, 0.2
    %v227 = vsel %vm225, %v222, %v226
    %v228 = vld [vmem:[%s5] sm:$0xff]
    %v229 = vld [vmem:[%s5 + $0x8] sm:$0xff]
    %v230 = vld [vmem:[%s5 + $0x10] sm:$0xff]
    %v231 = vld [vmem:[%s5 + $0x18] sm:$0xff]
    %v232 = vld [vmem:[%s5 + $0x20] sm:$0xff]
    %v233 = vld [vmem:[%s5 + $0x28] sm:$0xff]
    %v234 = vld [vmem:[%s5 + $0x30] sm:$0xff]
    %v235 = vld [vmem:[%s5 + $0x38] sm:$0xff]
    %v236 = vld [vmem:[%s5 + $0x40] sm:$0xff]
    %v237 = vld [vmem:[%s5 + $0x48] sm:$0xff]
    %v238 = vld [vmem:[%s5 + $0x50] sm:$0xff]
    %v239 = vld [vmem:[%s5 + $0x58] sm:$0xff]
    %v240 = vld [vmem:[%s5 + $0x60] sm:$0xff]
    %v241 = vld [vmem:[%s5 + $0x68] sm:$0xff]
    %v242 = vld [vmem:[%s5 + $0x70] sm:$0xff]
    %v243 = vld [vmem:[%s5 + $0x78] sm:$0xff]
    %v245 = vlaneseq
    %v246 = vshrl.u32 %v245, 7
    %v247 = vsub.s32 0, %v246
    %v248 = vrot.slane %v36, %v247
    %250 = vmatprep.subr.mxu0 0.0
    %251 = vmatpush1.msra.mxu0 %v228
    %252 = vmatprep.subr.mxu0 0.0
    %253 = vmatpush1.msra.mxu0 %v229
    %254 = vmatprep.subr.mxu0 0.0
    %255 = vmatpush1.msra.mxu0 %v230
    %256 = vmatprep.subr.mxu0 0.0
    %257 = vmatpush1.msra.mxu0 %v231
    %258 = vmatprep.subr.mxu0 0.0
    %259 = vmatpush1.msra.mxu0 %v232
    %260 = vmatprep.subr.mxu0 0.0
    %261 = vmatpush1.msra.mxu0 %v233
    %262 = vmatprep.subr.mxu0 0.0
    %263 = vmatpush1.msra.mxu0 %v234
    %264 = vmatprep.subr.mxu0 0.0
    %265 = vmatpush1.msra.mxu0 %v235
    %266 = vmatprep.subr.mxu0 0.0
    %267 = vmatpush1.msra.mxu0 %v236
    %268 = vmatprep.subr.mxu0 0.0
    %269 = vmatpush1.msra.mxu0 %v237
    %270 = vmatprep.subr.mxu0 0.0
    %271 = vmatpush1.msra.mxu0 %v238
    %272 = vmatprep.subr.mxu0 0.0
    %273 = vmatpush1.msra.mxu0 %v239
    %274 = vmatprep.subr.mxu0 0.0
    %275 = vmatpush1.msra.mxu0 %v240
    %276 = vmatprep.subr.mxu0 0.0
    %277 = vmatpush1.msra.mxu0 %v241
    %278 = vmatprep.subr.mxu0 0.0
    %279 = vmatpush1.msra.mxu0 %v242
    %280 = vmatprep.subr.mxu0 0.0
    %281 = vmatpush1.msra.mxu0 %v243
    %282 = vmatprep.subr.mxu0 0.0
    %283 = vmatpush1.msra.mxu0 0.0
    %284 = vmatprep.subr.mxu0 0.0
    %285 = vmatpush1.msra.mxu0 0.0
    %286 = vmatprep.subr.mxu0 0.0
    %287 = vmatpush1.msra.mxu0 0.0
    %288 = vmatprep.subr.mxu0 0.0
    %289 = vmatpush1.msra.mxu0 0.0
    %290 = vmatprep.subr.mxu0 0.0
    %291 = vmatpush1.msra.mxu0 0.0
    %292 = vmatprep.subr.mxu0 0.0
    %293 = vmatpush1.msra.mxu0 0.0
    %294 = vmatprep.subr.mxu0 0.0
    %295 = vmatpush1.msra.mxu0 0.0
    %296 = vmatprep.subr.mxu0 0.0
    %297 = vmatpush1.msra.mxu0 0.0
    %298 = vmatprep.subr.mxu0 0.0
    %299 = vmatpush1.msra.mxu0 0.0
    %300 = vmatprep.subr.mxu0 0.0
    %301 = vmatpush1.msra.mxu0 0.0
    %302 = vmatprep.subr.mxu0 0.0
    %303 = vmatpush1.msra.mxu0 0.0
    %304 = vmatprep.subr.mxu0 0.0
    %305 = vmatpush1.msra.mxu0 0.0
    %306 = vmatprep.subr.mxu0 0.0
    %307 = vmatpush1.msra.mxu0 0.0
    %308 = vmatprep.subr.mxu0 0.0
    %309 = vmatpush1.msra.mxu0 0.0
    %310 = vmatprep.subr.mxu0 0.0
    %311 = vmatpush1.msra.mxu0 0.0
    %312 = vmatprep.subr.mxu0 0.0
    %313 = vmatpush1.msra.mxu0 0.0
    %314 = vmatprep.mubr.f32.mxu0 0.0
    %315 = vmatmul.mubr.f32.gmra.mrb[0].mxu0 %v227
    %v316 = vpop.f32.mrb[0].mxu0
    %v317 = vadd.f32 %v248, %v316
    %v318 = vpop.f32.mrb[0].mxu0
    %319 = vdwg.mxu0
    %vm320 = vcmp.gt.f32.partialorder %v317, 0.0
    %v321 = vmul.f32 %v317, 0.2
    %v322 = vsel %vm320, %v317, %v321
    %v323 = vld [vmem:[%s7] sm:$0xff]
    %v324 = vld [vmem:[%s7 + $0x8] sm:$0xff]
    %v325 = vld [vmem:[%s7 + $0x10] sm:$0xff]
    %v326 = vld [vmem:[%s7 + $0x18] sm:$0xff]
    %v327 = vld [vmem:[%s7 + $0x20] sm:$0xff]
    %v328 = vld [vmem:[%s7 + $0x28] sm:$0xff]
    %v329 = vld [vmem:[%s7 + $0x30] sm:$0xff]
    %v330 = vld [vmem:[%s7 + $0x38] sm:$0xff]
    %v331 = vld [vmem:[%s7 + $0x40] sm:$0xff]
    %v332 = vld [vmem:[%s7 + $0x48] sm:$0xff]
    %v333 = vld [vmem:[%s7 + $0x50] sm:$0xff]
    %v334 = vld [vmem:[%s7 + $0x58] sm:$0xff]
    %v335 = vld [vmem:[%s7 + $0x60] sm:$0xff]
    %v336 = vld [vmem:[%s7 + $0x68] sm:$0xff]
    %v337 = vld [vmem:[%s7 + $0x70] sm:$0xff]
    %v338 = vld [vmem:[%s7 + $0x78] sm:$0xff]
    %v340 = vlaneseq
    %v341 = vshrl.u32 %v340, 7
    %v342 = vsub.s32 0, %v341
    %v343 = vrot.slane %v37, %v342
    %345 = vmatprep.subr.mxu0 0.0
    %346 = vmatpush1.msra.mxu0 %v323
    %347 = vmatprep.subr.mxu0 0.0
    %348 = vmatpush1.msra.mxu0 %v324
    %349 = vmatprep.subr.mxu0 0.0
    %350 = vmatpush1.msra.mxu0 %v325
    %351 = vmatprep.subr.mxu0 0.0
    %352 = vmatpush1.msra.mxu0 %v326
    %353 = vmatprep.subr.mxu0 0.0
    %354 = vmatpush1.msra.mxu0 %v327
    %355 = vmatprep.subr.mxu0 0.0
    %356 = vmatpush1.msra.mxu0 %v328
    %357 = vmatprep.subr.mxu0 0.0
    %358 = vmatpush1.msra.mxu0 %v329
    %359 = vmatprep.subr.mxu0 0.0
    %360 = vmatpush1.msra.mxu0 %v330
    %361 = vmatprep.subr.mxu0 0.0
    %362 = vmatpush1.msra.mxu0 %v331
    %363 = vmatprep.subr.mxu0 0.0
    %364 = vmatpush1.msra.mxu0 %v332
    %365 = vmatprep.subr.mxu0 0.0
    %366 = vmatpush1.msra.mxu0 %v333
    %367 = vmatprep.subr.mxu0 0.0
    %368 = vmatpush1.msra.mxu0 %v334
    %369 = vmatprep.subr.mxu0 0.0
    %370 = vmatpush1.msra.mxu0 %v335
    %371 = vmatprep.subr.mxu0 0.0
    %372 = vmatpush1.msra.mxu0 %v336
    %373 = vmatprep.subr.mxu0 0.0
    %374 = vmatpush1.msra.mxu0 %v337
    %375 = vmatprep.subr.mxu0 0.0
    %376 = vmatpush1.msra.mxu0 %v338
    %377 = vmatprep.subr.mxu0 0.0
    %378 = vmatpush1.msra.mxu0 0.0
    %379 = vmatprep.subr.mxu0 0.0
    %380 = vmatpush1.msra.mxu0 0.0
    %381 = vmatprep.subr.mxu0 0.0
    %382 = vmatpush1.msra.mxu0 0.0
    %383 = vmatprep.subr.mxu0 0.0
    %384 = vmatpush1.msra.mxu0 0.0
    %385 = vmatprep.subr.mxu0 0.0
    %386 = vmatpush1.msra.mxu0 0.0
    %387 = vmatprep.subr.mxu0 0.0
    %388 = vmatpush1.msra.mxu0 0.0
    %389 = vmatprep.subr.mxu0 0.0
    %390 = vmatpush1.msra.mxu0 0.0
    %391 = vmatprep.subr.mxu0 0.0
    %392 = vmatpush1.msra.mxu0 0.0
    %393 = vmatprep.subr.mxu0 0.0
    %394 = vmatpush1.msra.mxu0 0.0
    %395 = vmatprep.subr.mxu0 0.0
    %396 = vmatpush1.msra.mxu0 0.0
    %397 = vmatprep.subr.mxu0 0.0
    %398 = vmatpush1.msra.mxu0 0.0
    %399 = vmatprep.subr.mxu0 0.0
    %400 = vmatpush1.msra.mxu0 0.0
    %401 = vmatprep.subr.mxu0 0.0
    %402 = vmatpush1.msra.mxu0 0.0
    %403 = vmatprep.subr.mxu0 0.0
    %404 = vmatpush1.msra.mxu0 0.0
    %405 = vmatprep.subr.mxu0 0.0
    %406 = vmatpush1.msra.mxu0 0.0
    %407 = vmatprep.subr.mxu0 0.0
    %408 = vmatpush1.msra.mxu0 0.0
    %409 = vmatprep.mubr.f32.mxu0 0.0
    %410 = vmatmul.mubr.f32.gmra.mrb[0].mxu0 %v322
    %v411 = vpop.f32.mrb[0].mxu0
    %v412 = vadd.f32 %v343, %v411
    %v413 = vpop.f32.mrb[0].mxu0
    %414 = vdwg.mxu0
    %v415 = vxor.u32 %v412, 2147483648
    %v416 = vmul.f32 %v415, 1.442695
    %v417 = vpow.pop %v416
    %v418 = vadd.f32 %v417, 1.0
    %v419 = vrcp.pop %v418
    %v420 = vmul.f32 1.0, %v419
    %421 = vst [vmem:[#allocation2] sm:$0xff] %v420
    // Predicated region
    $region38: #{flexible_autoencoder.1} parent=1 // pred_check
      _
    $region39: #{flexible_autoencoder.1} parent=1 // pred_check_branch
      %423 = sbr.rel (0) target = $region41
    $region40: #{flexible_autoencoder.1} parent=1 // pred_region
      %s425 = ssub.s32 128, 128
      %426 = vsyncadd [#allocation3], %s425
      %s428 = sshll.u32 [#allocation2], 4
      %s429 = int_to_ptr.vmem [resolvable:$true] %s428
      %431 = dma.vmem_to_hbm [thread:$0]  %s429, 128, %s9, [#allocation3]
    $region41: #{flexible_autoencoder.1} parent=1 // pred_fallthru
      _
    // Predicated region
    $region42: #{flexible_autoencoder.1} parent=1 // pred_check
      _
    $region43: #{flexible_autoencoder.1} parent=1 // pred_check_branch
      %433 = sbr.rel (0) target = $region45
    $region44: #{flexible_autoencoder.1} parent=1 // pred_region
      %434 = dma.done [#allocation3], 128
    $region45: #{flexible_autoencoder.1} parent=1 // pred_fallthru
      _
    %435 = vsyncpa [#allocation3], 1

</llo_original>
